<compile_context>
chip_gen: v7x
topology: tpu7x:2x2x1
jax: 0.10.0
libtpu: 0.0.40
codegen_flags: <defaults>
</compile_context>

<pallas_src>
import functools

import jax
import jax.numpy as jnp
from jax.experimental import pallas as pl
from jax.experimental.pallas import tpu as pltpu


def _l2norm_kernel(x_ref, w_ref, o_ref, *, eps):
    # x_ref: (1, C, TILE)   w_ref: (1, C, 128) lane-broadcast weight
    # o_ref: (1, C, TILE)
    w = w_ref[:, :, 0:1].astype(jnp.float32)          # (1, C, 1), hoisted once
    x = x_ref[...].astype(jnp.float32)                # f32 accumulation regardless of I/O dtype
    # channel-wise L2 norm: x.pow(2).sum(1, keepdim=True).sqrt() + eps
    norm = jnp.sqrt(jnp.sum(x * x, axis=1, keepdims=True)) + eps
    inv = pl.reciprocal(norm, approx=False)           # EUP slot; exact for parity with true divide
    o_ref[...] = (w * x * inv).astype(o_ref.dtype)


def _vmem_budget_and_limit():
    """Generation-aware (buffer_budget_bytes, scoped_vmem_limit_bytes).

    v5e / v6e: 128 MiB physical VMEM per TensorCore -> be aggressive so large
    C*HW shapes still take big / full-extent blocks.
    v7x: only 64 MiB per TensorCore -> stay conservative so the double-buffered
    input + output blocks never overshoot.
    """
    phys = None
    try:
        phys = getattr(pltpu.get_tpu_info(), "vmem_capacity_bytes", None)
    except Exception:
        phys = None
    if phys is not None and phys >= 100 * 1024 * 1024:
        return 48 * 1024 * 1024, 64 * 1024 * 1024
    return 24 * 1024 * 1024, 32 * 1024 * 1024


def _pick_tile(hw, c, n_batch, itemsize, budget_bytes):
    """Pick a lane-dense spatial tile.

    The kernel is purely HBM-bound, so the VMEM-derived limit drives the tile:
    prefer the full spatial extent when it fits (one contiguous DMA per image,
    no masked tail store, fewest grid steps). Buffers in flight are the
    double-buffered input + output blocks ~= 4 * C * tile * itemsize bytes
    (the 128-lane weight slab is negligible).
    """
    per_lane = 4 * c * itemsize
    cap = max(128, (budget_bytes // per_lane) // 128 * 128)

    if hw <= cap:
        if n_batch >= 2 or hw < 1024:
            # Full-extent block: single lane-dense store, minimal grid steps.
            return hw
        # N == 1 and HW large enough to split: exactly two ~equal
        # 128-multiple blocks so v7x's second TensorCore gets balanced work
        # (each half stays >= 512 lanes, which matters most on v5e).
        half = ((hw + 1) // 2 + 127) // 128 * 128
        return min(cap, max(128, half))

    # HW > cap: prefer a multiple-of-128 tile that divides HW exactly
    # (keeps every output tile lane-dense; no masked vst on a tail).
    for t in range(cap, 127, -128):
        if hw % t == 0:
            return t
    return cap


def l2norm(x, weight, eps=1e-10):
    """x: (N, C, H, W); weight: (C,). Output dtype matches x (bf16 I/O OK)."""
    N, C, H, W = x.shape
    HW = H * W
    itemsize = jnp.dtype(x.dtype).itemsize

    x_flat = x.reshape(N, C, HW)
    # Pre-broadcast weight to a lane-dense (1, C, 128) slab: its (one-off,
    # constant-index_map) HBM->VMEM copy becomes a dense DMA rather than a
    # sublane-strided gather of C scalar words.
    w_slab = jnp.broadcast_to(weight.reshape(1, C, 1), (1, C, 128))

    budget_bytes, vmem_limit = _vmem_budget_and_limit()
    tile = _pick_tile(HW, C, N, itemsize, budget_bytes)
    grid = (N, pl.cdiv(HW, tile))

    # Advisory for XLA's scheduler: this custom call is bandwidth-heavy.
    cost = pl.CostEstimate(
        flops=int(3 * N * C * HW),
        transcendentals=int(2 * N * HW),
        bytes_accessed=int(2 * N * C * HW * itemsize
                           + C * jnp.dtype(weight.dtype).itemsize),
    )

    # TODO(synk): tiny-C shapes (C << 8) under-use vreg sublanes and are
    # grid-step-overhead bound; if such shapes matter in production, fold
    # several batch elements into one block or fall back to plain XLA.
    out_flat = pl.pallas_call(
        functools.partial(_l2norm_kernel, eps=eps),
        out_shape=jax.ShapeDtypeStruct((N, C, HW), x.dtype),
        grid_spec=pltpu.PrefetchScalarGridSpec(
            num_scalar_prefetch=0,
            grid=grid,
            in_specs=[
                pl.BlockSpec((1, C, tile), lambda n, s: (n, 0, s)),
                pl.BlockSpec((1, C, 128), lambda n, s: (0, 0, 0)),
            ],
            out_specs=pl.BlockSpec((1, C, tile), lambda n, s: (n, 0, s)),
        ),
        compiler_params=pltpu.CompilerParams(
            # Both grid axes are independent -> shard across TensorCores.
            # TODO(synk): if an xprof trace shows one idle TC at batch 1 on
            # v7x, switch the spatial axis to pltpu.CORE_PARALLEL.
            dimension_semantics=("parallel", "parallel"),
            vmem_limit_bytes=vmem_limit,
        ),
        cost_estimate=cost,
    )(x_flat, w_slab)

    return out_flat.reshape(N, C, H, W)


def l2norm_ref(x, weight, eps=1e-10):
    xf = x.astype(jnp.float32)
    norm = jnp.sqrt(jnp.sum(xf * xf, axis=1, keepdims=True)) + eps
    return weight.astype(jnp.float32)[None, :, None, None] * xf / norm


if __name__ == "__main__":
    key = jax.random.PRNGKey(0)
    scale = 20.0  # L2Norm weight is typically initialized to `scale`

    # 1) Small shape consistent with the module (full-extent block path).
    N, C, H, W = 2, 4, 16, 16
    x = jax.random.normal(key, (N, C, H, W), dtype=jnp.float32)
    weight = jnp.full((C,), scale, dtype=jnp.float32)
    out = jax.block_until_ready(l2norm(x, weight))
    ref = l2norm_ref(x, weight)
    assert out.shape == (N, C, H, W)
    assert jnp.allclose(out, ref, atol=1e-5, rtol=1e-5)

    # 2) N=1, SSD conv4_3-like 38x38 spatial map: exercises the batch-1
    #    two-block megacore split and the masked partial last tile.
    key2 = jax.random.PRNGKey(1)
    N2, C2, H2, W2 = 1, 8, 38, 38
    x2 = jax.random.normal(key2, (N2, C2, H2, W2), dtype=jnp.float32)
    w2 = jnp.full((C2,), scale, dtype=jnp.float32)
    out2 = jax.block_until_ready(l2norm(x2, w2))
    ref2 = l2norm_ref(x2, w2)
    assert jnp.allclose(out2, ref2, atol=1e-5, rtol=1e-5)

    # 3) Odd channel count (C=5): checks the sublane-padded channel reduction.
    key3 = jax.random.PRNGKey(2)
    N3, C3, H3, W3 = 2, 5, 11, 11
    x3 = jax.random.normal(key3, (N3, C3, H3, W3), dtype=jnp.float32)
    w3 = jnp.full((C3,), scale, dtype=jnp.float32)
    out3 = jax.block_until_ready(l2norm(x3, w3))
    ref3 = l2norm_ref(x3, w3)
    assert jnp.allclose(out3, ref3, atol=1e-5, rtol=1e-5)

    # 4) bf16 I/O (halves HBM traffic; f32 accumulation kept inside the kernel).
    key4 = jax.random.PRNGKey(3)
    x4 = jax.random.normal(key4, (2, 8, 16, 16), dtype=jnp.float32).astype(jnp.bfloat16)
    w4 = jnp.full((8,), scale, dtype=jnp.float32)
    out4 = jax.block_until_ready(l2norm(x4, w4))
    assert out4.dtype == jnp.bfloat16
    ref4 = l2norm_ref(x4, w4)
    assert jnp.allclose(out4.astype(jnp.float32), ref4, atol=0.5, rtol=2e-2)

    print("KERNEL_OK")
</pallas_src>

<mosaic_0001>
module attributes {stable_mosaic.version = 11 : i64} {
  func.func @_l2norm_kernel(%arg0: i32, %arg1: i32, %arg2: memref<1x4x256xf32, #tpu.memory_space<vmem>>, %arg3: memref<1x4x128xf32, #tpu.memory_space<vmem>>, %arg4: memref<1x4x256xf32, #tpu.memory_space<vmem>>) attributes {dimension_semantics = [#tpu.dimension_semantics<parallel>, #tpu.dimension_semantics<parallel>], iteration_bounds = array<i64: 2, 1>, scalar_prefetch = 0 : i64, scratch_operands = 0 : i64, tpu.core_type = #tpu.core_type<tc>, window_params = [{transform_indices = @transform_0, window_bounds = array<i64: 1, 4, 256>}, {pipeline_mode = #tpu.pipeline_mode<synchronous>, transform_indices = @transform_1, window_bounds = array<i64: 1, 4, 128>}, {transform_indices = @transform_2, window_bounds = array<i64: 1, 4, 256>}]} {
    %c0 = arith.constant 0 : index
    %c0_0 = arith.constant 0 : index
    %c0_1 = arith.constant 0 : index
    %0 = vector.load %arg3[%c0, %c0_0, %c0_1] : memref<1x4x128xf32, #tpu.memory_space<vmem>>, vector<1x4x1xf32>
    %c0_2 = arith.constant 0 : index
    %c0_3 = arith.constant 0 : index
    %c0_4 = arith.constant 0 : index
    %1 = vector.load %arg2[%c0_2, %c0_3, %c0_4] : memref<1x4x256xf32, #tpu.memory_space<vmem>>, vector<1x4x256xf32>
    %2 = arith.mulf %1, %1 : vector<1x4x256xf32>
    %cst = arith.constant dense<0.000000e+00> : vector<1x256xf32>
    %3 = vector.multi_reduction <add>, %2, %cst [1] : vector<1x4x256xf32> to vector<1x256xf32>
    %4 = vector.shape_cast %3 : vector<1x256xf32> to vector<1x1x256xf32>
    %5 = math.sqrt %4 : vector<1x1x256xf32>
    %cst_5 = arith.constant 1.000000e-10 : f32
    %6 = vector.broadcast %cst_5 : f32 to vector<1x1x256xf32>
    %7 = arith.addf %5, %6 : vector<1x1x256xf32>
    %8 = tpu.reciprocal %7 : vector<1x1x256xf32> -> vector<1x1x256xf32>
    %9 = vector.broadcast %0 : vector<1x4x1xf32> to vector<1x4x256xf32>
    %10 = arith.mulf %9, %1 : vector<1x4x256xf32>
    %11 = vector.broadcast %8 : vector<1x1x256xf32> to vector<1x4x256xf32>
    %12 = arith.mulf %10, %11 : vector<1x4x256xf32>
    %c0_6 = arith.constant 0 : index
    %c0_7 = arith.constant 0 : index
    %c0_8 = arith.constant 0 : index
    %13 = vector.load %arg4[%c0_6, %c0_7, %c0_8] : memref<1x4x256xf32, #tpu.memory_space<vmem>>, vector<1x4x256xf32>
    tpu.vector_store %arg4[%c0_6, %c0_7, %c0_8], %12 {strides = array<i32>} : memref<1x4x256xf32, #tpu.memory_space<vmem>>, vector<1x4x256xf32>,
    return
  }
  func.func @transform_0(%arg0: i32, %arg1: i32) -> (i32, i32, i32) {
    %c0_i32 = arith.constant 0 : i32
    %c0_i32_0 = arith.constant 0 : i32
    return %arg0, %c0_i32, %arg1 : i32, i32, i32
  }
  func.func @transform_1(%arg0: i32, %arg1: i32) -> (i32, i32, i32) {
    %c0_i32 = arith.constant 0 : i32
    %c0_i32_0 = arith.constant 0 : i32
    %c0_i32_1 = arith.constant 0 : i32
    %c0_i32_2 = arith.constant 0 : i32
    return %c0_i32, %c0_i32_0, %c0_i32_1 : i32, i32, i32
  }
  func.func @transform_2(%arg0: i32, %arg1: i32) -> (i32, i32, i32) {
    %c0_i32 = arith.constant 0 : i32
    %c0_i32_0 = arith.constant 0 : i32
    return %arg0, %c0_i32, %arg1 : i32, i32, i32
  }
}

</mosaic_0001>

<llo_original>
// kernel: tpu_custom_call.1
$region0: #{tpu_custom_call.1}
  #allocation0 [shape = 'u32[]', space=smem, size = 0x4, offset = 0x4, fixed_abs, tag = 'smem constant byte address 0x4 - core index']
  #allocation1 [shape = 'u32[144,128]{1,0:T(1,128)}', space=vmem, size = 0x12000, scoped, tag = 'internal scratch']
  %s0 = inlined_call_operand.hbm [shape: f32[2,4,256], index: 0, kind: input, shape index: {}]
  %s1 = inlined_call_operand.hbm [shape: f32[1,4,128], index: 1, kind: input, shape index: {}]
  %s2 = inlined_call_operand.hbm [shape: f32[2,4,256], index: 2, kind: output, shape index: {}]
  %s3 = sld [smem:[#allocation0]]
  $region49: #{tpu_custom_call.1} parent=0
    _
  %s5 = ssub.s32 1, %s3
  %s6 = scalar_select 0, %s5, %s3
  $region1: #{tpu_custom_call.1} parent=0
    #allocation2 [shape = 'u8[8192]{0}', space=vmem, size = 0x2000, scoped, tag = 'input window, operand 0']
    #allocation3 [shape = 's32[2]{0}', space=sflag, size = 0x8, scoped, tag = 'scoped memory for tpu_custom_call.1']
    #allocation4 [shape = 's32[2]{0}', space=sflag, size = 0x8, scoped, tag = 'scoped memory for tpu_custom_call.1']
    #allocation5 [shape = 'u8[2048]{0}', space=vmem, size = 0x800, scoped, tag = 'input window, operand 1, single buffered']
    #allocation6 [shape = 's32[1]{0}', space=sflag, size = 0x4, scoped, tag = 'scoped memory for tpu_custom_call.1']
    #allocation7 [shape = 'u8[8192]{0}', space=vmem, size = 0x2000, scoped, tag = 'output window, operand 0']
    %7 = vsyncpa [#allocation3], 0
    %s8 = scalar_lea.sflag [#allocation3], 1
    %9 = vsyncpa %s8, 0
    %10 = vsyncpa [#allocation6], 0
    %11 = vsyncpa [#allocation4], 0
    %s12 = scalar_lea.sflag [#allocation4], 1
    %13 = vsyncpa %s12, 0
    loop: start=0, step=1, limit=4
    $region2: #{tpu_custom_call.1} parent=1 // loop_pre_header
      _
    $region3: #{tpu_custom_call.1} parent=1 // loop_header
      %s15 = sphi 0, %s19
      %p16 = scmp.ge.s32.totalorder %s15, 4
      %s22 = sphi 0, %s34
      %s23 = sphi 0, %s30
      %s24 = sphi 0, %s22
      %s25 = sphi 0, %s23
      %s26 = sphi 0, %s24
      %s27 = sphi 0, %s25
      %s39 = sphi 0, %s41
      %s42 = sphi 0, %s39
      %s43 = sphi 0, %s42
      %s59 = sphi 0, %s43
      %s63 = sphi 0, %s63
      %s65 = sphi 0, %s63
      %s66 = sphi 0, %s65
      %s80 = sphi 0, %s66
      %s88 = sphi 0, %s90
      %s91 = sphi 0, %s88
      %s92 = sphi 0, %s91
      %s108 = sphi 0, %s92
    $region4: #{tpu_custom_call.1} parent=1 // loop_header_branch
      %18 = sbr.rel (%p16) target = $region8
    $region5: #{tpu_custom_call.1} parent=1 // loop_body
      %s20 = ssub.s32 %s15, 1
      %s21 = ssub.s32 %s15, 2
      %s28 = sadd.s32 1, %s23
      %p29 = scmp.ge.s32.totalorder %s28, 1
      %s30 = scalar_select %p29, 0, %s28
      %s31 = sadd.s32 1, %s22
      %s32 = scalar_select %p29, %s31, %s22
      %p33 = scmp.ge.s32.totalorder %s32, 2
      %s34 = scalar_select %p33, 0, %s32
      %s35 = ssub.s32 %s22, %s34
      %s36 = ssub.s32 %s23, %s30
      %s37 = sor.u32 %s35, %s36
      %p38 = scmp.eq.s32.totalorder %s37, 0
      %s40 = sadd.s32 %s39, 1
      %s41 = scalar_select %p38, %s39, %s40
      %p44 = pneg %p38
      %p45 = scmp.eq.s32.totalorder %s15, 1
      %p46 = por %p44, %p45
      %p47 = scmp.ne.s32.totalorder %s39, %s42
      %p48 = scmp.eq.s32.totalorder %s15, 0
      %p49 = por %p47, %p48
      %p50 = scmp.ne.s32.totalorder %s39, %s42
      %p51 = scmp.eq.s32.totalorder %s20, 1
      %p52 = por %p50, %p51
      %p53 = scmp.ne.s32.totalorder %s42, %s43
      %p54 = scmp.eq.s32.totalorder %s20, 0
      %p55 = por %p53, %p54
      %p56 = scmp.ne.s32.totalorder %s42, %s43
      %p57 = scmp.eq.s32.totalorder %s21, 1
      %p58 = por %p56, %p57
      %p60 = scmp.ne.s32.totalorder %s43, %s59
      %p61 = scmp.eq.s32.totalorder %s21, 0
      %p62 = por %p60, %p61
      %s64 = sadd.s32 %s63, 1
      %p67 = scmp.eq.s32.totalorder %s15, 1
      %p68 = scmp.ne.s32.totalorder %s63, %s65
      %p69 = scmp.eq.s32.totalorder %s15, 0
      %p70 = por %p68, %p69
      %p71 = scmp.ne.s32.totalorder %s63, %s65
      %p72 = scmp.eq.s32.totalorder %s20, 1
      %p73 = por %p71, %p72
      %p74 = scmp.ne.s32.totalorder %s65, %s66
      %p75 = scmp.eq.s32.totalorder %s20, 0
      %p76 = por %p74, %p75
      %p77 = scmp.ne.s32.totalorder %s65, %s66
      %p78 = scmp.eq.s32.totalorder %s21, 1
      %p79 = por %p77, %p78
      %p81 = scmp.ne.s32.totalorder %s66, %s80
      %p82 = scmp.eq.s32.totalorder %s21, 0
      %p83 = por %p81, %p82
      %s84 = ssub.s32 %s22, %s34
      %s85 = ssub.s32 %s23, %s30
      %s86 = sor.u32 %s84, %s85
      %p87 = scmp.eq.s32.totalorder %s86, 0
      %s89 = sadd.s32 %s88, 1
      %s90 = scalar_select %p87, %s88, %s89
      %p93 = pneg %p87
      %p94 = scmp.eq.s32.totalorder %s15, 1
      %p95 = por %p93, %p94
      %p96 = scmp.ne.s32.totalorder %s88, %s91
      %p97 = scmp.eq.s32.totalorder %s15, 0
      %p98 = por %p96, %p97
      %p99 = scmp.ne.s32.totalorder %s88, %s91
      %p100 = scmp.eq.s32.totalorder %s20, 1
      %p101 = por %p99, %p100
      %p102 = scmp.ne.s32.totalorder %s91, %s92
      %p103 = scmp.eq.s32.totalorder %s20, 0
      %p104 = por %p102, %p103
      %p105 = scmp.ne.s32.totalorder %s91, %s92
      %p106 = scmp.eq.s32.totalorder %s21, 1
      %p107 = por %p105, %p106
      %p109 = scmp.ne.s32.totalorder %s92, %s108
      %p110 = scmp.eq.s32.totalorder %s21, 0
      %p111 = por %p109, %p110
      %p112 = scmp.le.s32.totalorder 1, %s15
      %p113 = scmp.lt.s32.totalorder %s15, 3
      %p114 = pnand %p112, %p113
      %p115 = pneg %p114
      // Predicated region
      $region9: #{tpu_custom_call.1} parent=5 // pred_check
        _
      $region10: #{tpu_custom_call.1} parent=5 // pred_check_branch
        %117 = sbr.rel (%p114) target = $region12
      $region11: #{tpu_custom_call.1} parent=5 // pred_region
        %s118 = ssub.s32 %s15, 1
        // Predicated region
        $region13: #{tpu_custom_call.1} parent=11 // pred_check
          %p119 = pneg %p76
        $region14: #{tpu_custom_call.1} parent=11 // pred_check_branch
          %121 = sbr.rel (%p119) target = $region16
        $region15: #{tpu_custom_call.1} parent=11 // pred_region
          %s123 = ssub.s32 64, 64
          %124 = vsyncadd [#allocation6], %s123
          %s126 = sshll.u32 [#allocation5], 4
          %s127 = int_to_ptr.vmem [resolvable:$true] %s126
          %129 = dma.hbm_to_vmem [thread:$0]  %s1, 64, %s127, [#allocation6]
        $region16: #{tpu_custom_call.1} parent=11 // pred_fallthru
          _
      $region12: #{tpu_custom_call.1} parent=5 // pred_fallthru
        _
      %p130 = scmp.lt.s32.totalorder %s15, 2
      // Predicated region
      $region17: #{tpu_custom_call.1} parent=5 // pred_check
        %p131 = pneg %p130
      $region18: #{tpu_custom_call.1} parent=5 // pred_check_branch
        %133 = sbr.rel (%p131) target = $region20
      $region19: #{tpu_custom_call.1} parent=5 // pred_region
        // Predicated region
        $region21: #{tpu_custom_call.1} parent=19 // pred_check
          %p134 = pneg %p49
        $region22: #{tpu_custom_call.1} parent=19 // pred_check_branch
          %136 = sbr.rel (%p134) target = $region24
        $region23: #{tpu_custom_call.1} parent=19 // pred_region
          %s137 = sand.u32 %s39, 1
          %s138 = scalar_lea.sflag [#allocation3], %s137
          %s139 = sand.u32 %s39, 1
          %s140 = smul.addr %s139, 8
          %s141 = scalar_lea.vmem [#allocation2], %s140
          %s142 = smul.u32 2, %s23
          %s144 = ssub.s32 128, 128
          %145 = vsyncadd %s138, %s144
          %s146 = smul.addr %s22, 2
          %s147 = sadd.s32 %s142, %s146
          %s148 = smul.addr %s147, 64
          %s149 = scalar_lea.hbm %s0, %s148
          %s151 = sshll.u32 %s141, 4
          %s152 = int_to_ptr.vmem [resolvable:$true] %s151
          %154 = dma.hbm_to_vmem [thread:$0]  %s149, 128, %s152, %s138
        $region24: #{tpu_custom_call.1} parent=19 // pred_fallthru
          _
      $region20: #{tpu_custom_call.1} parent=5 // pred_fallthru
        _
      %p155 = scmp.le.s32.totalorder 1, %s15
      %p156 = scmp.lt.s32.totalorder %s15, 3
      %p157 = pnand %p155, %p156
      %p158 = pneg %p157
      // Predicated region
      $region25: #{tpu_custom_call.1} parent=5 // pred_check
        _
      $region26: #{tpu_custom_call.1} parent=5 // pred_check_branch
        %160 = sbr.rel (%p157) target = $region28
      $region27: #{tpu_custom_call.1} parent=5 // pred_region
        %s161 = ssub.s32 %s15, 1
        %s162 = sand.u32 %s42, 1
        %s163 = scalar_lea.sflag [#allocation3], %s162
        %s164 = sand.u32 %s42, 1
        %s165 = smul.addr %s164, 8
        %s166 = scalar_lea.vmem [#allocation2], %s165
        // Predicated region
        $region29: #{tpu_custom_call.1} parent=27 // pred_check
          %p167 = pneg %p55
        $region30: #{tpu_custom_call.1} parent=27 // pred_check_branch
          %169 = sbr.rel (%p167) target = $region32
        $region31: #{tpu_custom_call.1} parent=27 // pred_region
          %170 = dma.done %s163, 128
        $region32: #{tpu_custom_call.1} parent=27 // pred_fallthru
          _
        // Predicated region
        $region33: #{tpu_custom_call.1} parent=27 // pred_check
          %p171 = pneg %p76
        $region34: #{tpu_custom_call.1} parent=27 // pred_check_branch
          %173 = sbr.rel (%p171) target = $region36
        $region35: #{tpu_custom_call.1} parent=27 // pred_region
          %174 = dma.done [#allocation6], 64
        $region36: #{tpu_custom_call.1} parent=27 // pred_fallthru
          _
        %s175 = sand.u32 %s42, 1
        %s176 = scalar_lea.sflag [#allocation3], %s175
        %s177 = sand.u32 %s42, 1
        %s178 = smul.addr %s177, 8
        %s179 = scalar_lea.vmem [#allocation2], %s178
        %p180 = pneg %p55
        %p181 = pneg %p52
        %p182 = pneg %p76
        %p183 = pneg %p73
        %p184 = pneg %p104
        %p185 = pneg %p101
        %s186 = sand.u32 %s91, 1
        %s187 = scalar_lea.sflag [#allocation4], %s186
        %s188 = sand.u32 %s91, 1
        %s189 = smul.addr %s188, 8
        %s190 = scalar_lea.vmem [#allocation7], %s189
        %s191 = smul.u32 2, %s25
        %s192 = smul.u32 2, %s25
        %v193 = vld [vmem:[#allocation5] sm:$0xf]
        %v194 = vld [vmem:[%s166] sm:$0xff]
        %v195 = vmul.f32 %v194, %v194
        %v197 = vcombine.high %v195, %v195
        %vm199 = vcmask 1043456
        %v200 = vsel %vm199, %v195, 0.0
        %v201 = vrot.slane %v200, 4
        %v202 = vadd.f32 %v200, %v201
        %v203 = vrot.slane %v202, 2
        %v204 = vadd.f32 %v202, %v203
        %v205 = vrot.slane %v204, 1
        %v206 = vadd.f32 %v204, %v205
        %v207 = vsel %vm199, %v197, 0.0
        %v208 = vrot.slane %v207, 4
        %v209 = vadd.f32 %v207, %v208
        %v210 = vrot.slane %v209, 2
        %v211 = vadd.f32 %v209, %v210
        %v212 = vrot.slane %v211, 1
        %v213 = vadd.f32 %v211, %v212
        %v214 = vrsqrt.pop %v206
        %v215 = vmul.f32 %v206, %v214
        %vm216 = vcmp.eq.f32.partialorder %v206, inf
        %v217 = vsel %vm216, %v206, %v215
        %vm218 = vcmp.eq.f32.partialorder %v206, 0.0
        %v219 = vand.u32 %v206, 2147483648
        %v220 = vsel %vm218, %v219, %v217
        %v221 = vrsqrt.pop %v213
        %v222 = vmul.f32 %v213, %v221
        %vm223 = vcmp.eq.f32.partialorder %v213, inf
        %v224 = vsel %vm223, %v213, %v222
        %vm225 = vcmp.eq.f32.partialorder %v213, 0.0
        %v226 = vand.u32 %v213, 2147483648
        %v227 = vsel %vm225, %v226, %v224
        %v228 = vadd.f32 %v220, 1e-10
        %v229 = vadd.f32 %v227, 1e-10
        %v230 = vrcp.pop %v228
        %v231 = vrcp.pop %v229
        %233 = vset.pattern.permute.xlu0 0
        %234 = vperm.xlu0 %233, %v193
        %v235 = vpop.permute.xlu0 %234
        %v238 = vcombine.high %v194, %v194
        %v240 = vmul.f32 %v235, %v194
        %v241 = vmul.f32 %v235, %v238
        %v242 = vmul.f32 %v240, %v230
        %v243 = vmul.f32 %v241, %v231
        %v246 = vcombine.low %v242, %v243
        %248 = vst [vmem:[%s190] sm:$0xff] %v246
        %s249 = sand.u32 %s91, 1
        %s250 = scalar_lea.sflag [#allocation4], %s249
        %s251 = sand.u32 %s91, 1
        %s252 = smul.addr %s251, 8
        %s253 = scalar_lea.vmem [#allocation7], %s252
        // Predicated region
        $region37: #{tpu_custom_call.1} parent=27 // pred_check
          %p254 = pneg %p101
        $region38: #{tpu_custom_call.1} parent=27 // pred_check_branch
          %256 = sbr.rel (%p254) target = $region40
        $region39: #{tpu_custom_call.1} parent=27 // pred_region
          %s257 = smul.u32 2, %s25
          %s259 = ssub.s32 128, 128
          %260 = vsyncadd %s250, %s259
          %s261 = smul.addr %s24, 2
          %s262 = sadd.s32 %s257, %s261
          %s263 = smul.addr %s262, 64
          %s264 = scalar_lea.hbm %s2, %s263
          %s266 = sshll.u32 %s253, 4
          %s267 = int_to_ptr.vmem [resolvable:$true] %s266
          %269 = dma.vmem_to_hbm [thread:$0]  %s267, 128, %s264, %s250
        $region40: #{tpu_custom_call.1} parent=27 // pred_fallthru
          _
      $region28: #{tpu_custom_call.1} parent=5 // pred_fallthru
        _
      %p270 = scmp.le.s32.totalorder 2, %s15
      // Predicated region
      $region41: #{tpu_custom_call.1} parent=5 // pred_check
        %p271 = pneg %p270
      $region42: #{tpu_custom_call.1} parent=5 // pred_check_branch
        %273 = sbr.rel (%p271) target = $region44
      $region43: #{tpu_custom_call.1} parent=5 // pred_region
        %s274 = ssub.s32 %s15, 2
        // Predicated region
        $region45: #{tpu_custom_call.1} parent=43 // pred_check
          %p275 = pneg %p107
        $region46: #{tpu_custom_call.1} parent=43 // pred_check_branch
          %277 = sbr.rel (%p275) target = $region48
        $region47: #{tpu_custom_call.1} parent=43 // pred_region
          %s278 = sand.u32 %s92, 1
          %s279 = scalar_lea.sflag [#allocation4], %s278
          %s280 = sand.u32 %s92, 1
          %s281 = smul.addr %s280, 8
          %s282 = scalar_lea.vmem [#allocation7], %s281
          %283 = dma.done %s279, 128
        $region48: #{tpu_custom_call.1} parent=43 // pred_fallthru
          _
      $region44: #{tpu_custom_call.1} parent=5 // pred_fallthru
        _
    $region6: #{tpu_custom_call.1} parent=1 // loop_footer
      %s19 = sadd.s32 1, %s15
    $region7: #{tpu_custom_call.1} parent=1 // loop_footer_branch
      %14 = sbr.rel target = $region3
    $region8: #{tpu_custom_call.1} parent=1 // loop_exit
      _
    %284 = vsyncpa [#allocation3], 1
    %s285 = scalar_lea.sflag [#allocation3], 1
    %286 = vsyncpa %s285, 1
    %287 = vsyncpa [#allocation6], 1
    %288 = vsyncpa [#allocation4], 1
    %s289 = scalar_lea.sflag [#allocation4], 1
    %290 = vsyncpa %s289, 1

</llo_original>
